<compile_context>
chip_gen: v5e
topology: v5e:2x2
jax: 0.10.0
libtpu: 0.0.40
codegen_flags: <defaults>
</compile_context>

<pallas_src>
import functools
import math

import jax
import jax.numpy as jnp
from jax.experimental import pallas as pl
from jax.experimental.pallas import tpu as pltpu

LEAKY_SLOPE = 0.01   # nn.LeakyReLU default negative_slope
BN_EPS = 1e-5        # nn.BatchNorm1d default eps
LANE = 128           # pad every feature dim to the TPU lane width


# ----------------------------------------------------------------------------
# Fused kernel: all layers in one body, unrolled in Python.
# ----------------------------------------------------------------------------
def fused_autoencoder_kernel(x_ref, w_ref, b_ref, gamma_ref, beta_ref, o_ref,
                             *, num_layers, batch):
    inv_b = 1.0 / float(batch)
    y = x_ref[...]                                   # (batch, LANE) f32
    for l in range(num_layers):
        # Linear (MXU, f32 accumulation) + bias. Padded rows/cols of W are zero.
        z = jnp.dot(y, w_ref[l], preferred_element_type=jnp.float32) + b_ref[l]
        # LeakyReLU(negative_slope=0.01) as a single vmax.
        z = jnp.maximum(z, LEAKY_SLOPE * z)
        # BatchNorm1d (train): one-pass biased batch statistics per feature.
        s1 = jnp.sum(z, axis=0, keepdims=True)
        s2 = jnp.sum(z * z, axis=0, keepdims=True)
        mean = s1 * inv_b
        var = jnp.maximum(s2 * inv_b - mean * mean, 0.0)
        y = (z - mean) * jax.lax.rsqrt(var + BN_EPS) * gamma_ref[l] + beta_ref[l]
        # Dropout(p=0.0) is the identity.
    o_ref[...] = y


def autoencoder_forward_pallas(x_padded, w_stack, b_stack, gamma_stack,
                               beta_stack, *, out_features):
    """Run the whole autoencoder in one pallas_call; slice off lane padding."""
    batch = x_padded.shape[0]
    num_layers = w_stack.shape[0]

    vmem = pl.BlockSpec(memory_space=pltpu.MemorySpace.VMEM)

    flops = num_layers * (2 * batch * LANE * LANE + 10 * batch * LANE)
    bytes_accessed = 4 * (x_padded.size + w_stack.size + b_stack.size
                          + gamma_stack.size + beta_stack.size + batch * LANE)

    out_padded = pl.pallas_call(
        functools.partial(fused_autoencoder_kernel,
                          num_layers=num_layers, batch=batch),
        out_shape=jax.ShapeDtypeStruct((batch, LANE), jnp.float32),
        in_specs=[vmem, vmem, vmem, vmem, vmem],
        out_specs=vmem,
        cost_estimate=pl.CostEstimate(
            flops=flops,
            transcendentals=num_layers * LANE,
            bytes_accessed=bytes_accessed),
    )(x_padded, w_stack, b_stack, gamma_stack, beta_stack)

    return out_padded[:, :out_features]


# ----------------------------------------------------------------------------
# Model construction helpers (mirror AutoEncoder.create_{encoding,decoder}).
# ----------------------------------------------------------------------------
def layer_dims_from_build_params(build_params):
    total_layers = build_params['encoding']['total_layers']
    latent_dims = build_params['latent']['dimensions']
    input_features = build_params['data']['input_features']
    scale = build_params['encoding'].get('scale')

    if scale is not None:
        enc_dims = [latent_dims * scale ** (total_layers - i) for i in range(total_layers)]
        dec_dims = [latent_dims * scale ** (i + 1) for i in range(total_layers)]
    else:
        dense_dim = build_params['encoding']['dimensions']
        enc_dims = [dense_dim] * total_layers
        dec_dims = [dense_dim] * total_layers

    dims = []
    prev = input_features
    for d in enc_dims:
        dims.append((prev, d))
        prev = d
    dims.append((prev, latent_dims))          # latent layer (end of encoder)
    prev = latent_dims
    for d in dec_dims:
        dims.append((prev, d))
        prev = d
    dims.append((prev, input_features))       # final decode layer
    return dims


def init_params(key, layer_dims):
    """Unpadded params: Linear W/b random (PyTorch-style bound), BN gamma=1, beta=0."""
    params = []
    for (fin, fout) in layer_dims:
        key, kw, kb = jax.random.split(key, 3)
        bound = 1.0 / math.sqrt(float(fin))
        w = jax.random.uniform(kw, (fin, fout), jnp.float32, -bound, bound)
        b = jax.random.uniform(kb, (1, fout), jnp.float32, -bound, bound)
        gamma = jnp.ones((1, fout), jnp.float32)
        beta = jnp.zeros((1, fout), jnp.float32)
        params.append((w, b, gamma, beta))
    return params


def pack_params(params, lane=LANE):
    """Zero-pad every layer to (lane, lane) and stack into lane-dense slabs."""
    n = len(params)
    w_stack = jnp.zeros((n, lane, lane), jnp.float32)
    b_stack = jnp.zeros((n, 1, lane), jnp.float32)
    g_stack = jnp.zeros((n, 1, lane), jnp.float32)
    beta_stack = jnp.zeros((n, 1, lane), jnp.float32)
    for i, (w, b, g, bt) in enumerate(params):
        fin, fout = w.shape
        assert fin <= lane and fout <= lane, "layer wider than one lane tile"
        w_stack = w_stack.at[i, :fin, :fout].set(w)
        b_stack = b_stack.at[i, 0, :fout].set(b[0])
        g_stack = g_stack.at[i, 0, :fout].set(g[0])
        beta_stack = beta_stack.at[i, 0, :fout].set(bt[0])
    return w_stack, b_stack, g_stack, beta_stack


def reference_forward(x, params):
    """Pure-JAX reference of the PyTorch forward (train-mode BN, dropout p=0)."""
    y = x
    for (w, b, gamma, beta) in params:
        z = y @ w + b
        z = jnp.where(z >= 0.0, z, LEAKY_SLOPE * z)
        mean = jnp.mean(z, axis=0, keepdims=True)
        var = jnp.mean((z - mean) ** 2, axis=0, keepdims=True)
        y = (z - mean) / jnp.sqrt(var + BN_EPS) * gamma + beta
    return y


# ----------------------------------------------------------------------------
# Demo / self-check
# ----------------------------------------------------------------------------
if __name__ == "__main__":
    build_params = {
        'data': {'input_features': 32},
        'encoding': {'total_layers': 2, 'scale': 2},
        'latent': {'dimensions': 8},
    }
    # Layers: (32->32)(32->16)(16->8) encoder, (8->16)(16->32)(32->32) decoder.
    dims = layer_dims_from_build_params(build_params)
    in_f = build_params['data']['input_features']

    key = jax.random.PRNGKey(0)
    key, kx = jax.random.split(key)
    batch = 8
    x = jax.random.normal(kx, (batch, in_f), jnp.float32)

    params = init_params(key, dims)
    w_stack, b_stack, g_stack, beta_stack = pack_params(params)

    # Lane-dense input slab (zero-padded features).
    x_padded = jnp.zeros((batch, LANE), jnp.float32).at[:, :in_f].set(x)

    forward = jax.jit(functools.partial(autoencoder_forward_pallas,
                                        out_features=in_f))
    recon = forward(x_padded, w_stack, b_stack, g_stack, beta_stack)
    jax.block_until_ready(recon)

    assert recon.shape == (batch, in_f)
    assert recon.dtype == jnp.float32

    ref = reference_forward(x, params)
    assert jnp.allclose(recon, ref, rtol=1e-3, atol=1e-3), \
        f"max abs err {jnp.max(jnp.abs(recon - ref))}"

    print("KERNEL_OK")
</pallas_src>

<mosaic_0001>
module attributes {stable_mosaic.version = 11 : i64} {
  func.func @fused_autoencoder_kernel(%arg0: memref<8x128xf32, #tpu.memory_space<vmem>>, %arg1: memref<6x128x128xf32, #tpu.memory_space<vmem>>, %arg2: memref<6x1x128xf32, #tpu.memory_space<vmem>>, %arg3: memref<6x1x128xf32, #tpu.memory_space<vmem>>, %arg4: memref<6x1x128xf32, #tpu.memory_space<vmem>>, %arg5: memref<8x128xf32, #tpu.memory_space<vmem>>) attributes {dimension_semantics = [], scalar_prefetch = 0 : i64, scratch_operands = 0 : i64, tpu.core_type = #tpu.core_type<tc>} {
    %c0 = arith.constant 0 : index
    %c0_0 = arith.constant 0 : index
    %0 = vector.load %arg0[%c0, %c0_0] : memref<8x128xf32, #tpu.memory_space<vmem>>, vector<8x128xf32>
    %c0_1 = arith.constant 0 : index
    %c0_2 = arith.constant 0 : index
    %c0_3 = arith.constant 0 : index
    %1 = vector.load %arg1[%c0_1, %c0_2, %c0_3] : memref<6x128x128xf32, #tpu.memory_space<vmem>>, vector<1x128x128xf32>
    %2 = vector.shape_cast %1 : vector<1x128x128xf32> to vector<128x128xf32>
    %cst = arith.constant dense<0.000000e+00> : vector<8x128xf32>
    %3 = tpu.matmul %0, %2, %cst {dimension_numbers = #tpu.dot_dimension_numbers<[1], [0], [0], [1], [0, 0, 1, 1], [], []>} : vector<8x128xf32>, vector<128x128xf32>, vector<8x128xf32> -> vector<8x128xf32>
    %c0_4 = arith.constant 0 : index
    %c0_5 = arith.constant 0 : index
    %c0_6 = arith.constant 0 : index
    %4 = vector.load %arg2[%c0_4, %c0_5, %c0_6] : memref<6x1x128xf32, #tpu.memory_space<vmem>>, vector<1x1x128xf32>
    %5 = vector.shape_cast %4 : vector<1x1x128xf32> to vector<1x128xf32>
    %6 = vector.broadcast %5 : vector<1x128xf32> to vector<8x128xf32>
    %7 = arith.addf %3, %6 : vector<8x128xf32>
    %cst_7 = arith.constant 0.00999999977 : f32
    %8 = vector.broadcast %cst_7 : f32 to vector<8x128xf32>
    %9 = arith.mulf %8, %7 : vector<8x128xf32>
    %10 = arith.maximumf %7, %9 : vector<8x128xf32>
    %cst_8 = arith.constant dense<0.000000e+00> : vector<128xf32>
    %11 = vector.multi_reduction <add>, %10, %cst_8 [0] : vector<8x128xf32> to vector<128xf32>
    %12 = vector.shape_cast %11 : vector<128xf32> to vector<1x128xf32>
    %13 = arith.mulf %10, %10 : vector<8x128xf32>
    %cst_9 = arith.constant dense<0.000000e+00> : vector<128xf32>
    %14 = vector.multi_reduction <add>, %13, %cst_9 [0] : vector<8x128xf32> to vector<128xf32>
    %15 = vector.shape_cast %14 : vector<128xf32> to vector<1x128xf32>
    %cst_10 = arith.constant 1.250000e-01 : f32
    %16 = vector.broadcast %cst_10 : f32 to vector<1x128xf32>
    %17 = arith.mulf %12, %16 : vector<1x128xf32>
    %cst_11 = arith.constant 1.250000e-01 : f32
    %18 = vector.broadcast %cst_11 : f32 to vector<1x128xf32>
    %19 = arith.mulf %15, %18 : vector<1x128xf32>
    %20 = arith.mulf %17, %17 : vector<1x128xf32>
    %21 = arith.subf %19, %20 : vector<1x128xf32>
    %cst_12 = arith.constant 0.000000e+00 : f32
    %22 = vector.broadcast %cst_12 : f32 to vector<1x128xf32>
    %23 = arith.maximumf %21, %22 : vector<1x128xf32>
    %24 = vector.broadcast %17 : vector<1x128xf32> to vector<8x128xf32>
    %25 = arith.subf %10, %24 : vector<8x128xf32>
    %cst_13 = arith.constant 9.99999974E-6 : f32
    %26 = vector.broadcast %cst_13 : f32 to vector<1x128xf32>
    %27 = arith.addf %23, %26 : vector<1x128xf32>
    %28 = math.rsqrt %27 : vector<1x128xf32>
    %29 = vector.broadcast %28 : vector<1x128xf32> to vector<8x128xf32>
    %30 = arith.mulf %25, %29 : vector<8x128xf32>
    %c0_14 = arith.constant 0 : index
    %c0_15 = arith.constant 0 : index
    %c0_16 = arith.constant 0 : index
    %31 = vector.load %arg3[%c0_14, %c0_15, %c0_16] : memref<6x1x128xf32, #tpu.memory_space<vmem>>, vector<1x1x128xf32>
    %32 = vector.shape_cast %31 : vector<1x1x128xf32> to vector<1x128xf32>
    %33 = vector.broadcast %32 : vector<1x128xf32> to vector<8x128xf32>
    %34 = arith.mulf %30, %33 : vector<8x128xf32>
    %c0_17 = arith.constant 0 : index
    %c0_18 = arith.constant 0 : index
    %c0_19 = arith.constant 0 : index
    %35 = vector.load %arg4[%c0_17, %c0_18, %c0_19] : memref<6x1x128xf32, #tpu.memory_space<vmem>>, vector<1x1x128xf32>
    %36 = vector.shape_cast %35 : vector<1x1x128xf32> to vector<1x128xf32>
    %37 = vector.broadcast %36 : vector<1x128xf32> to vector<8x128xf32>
    %38 = arith.addf %34, %37 : vector<8x128xf32>
    %c1 = arith.constant 1 : index
    %c0_20 = arith.constant 0 : index
    %c0_21 = arith.constant 0 : index
    %39 = vector.load %arg1[%c1, %c0_20, %c0_21] : memref<6x128x128xf32, #tpu.memory_space<vmem>>, vector<1x128x128xf32>
    %40 = vector.shape_cast %39 : vector<1x128x128xf32> to vector<128x128xf32>
    %cst_22 = arith.constant dense<0.000000e+00> : vector<8x128xf32>
    %41 = tpu.matmul %38, %40, %cst_22 {dimension_numbers = #tpu.dot_dimension_numbers<[1], [0], [0], [1], [0, 0, 1, 1], [], []>} : vector<8x128xf32>, vector<128x128xf32>, vector<8x128xf32> -> vector<8x128xf32>
    %c1_23 = arith.constant 1 : index
    %c0_24 = arith.constant 0 : index
    %c0_25 = arith.constant 0 : index
    %42 = vector.load %arg2[%c1_23, %c0_24, %c0_25] : memref<6x1x128xf32, #tpu.memory_space<vmem>>, vector<1x1x128xf32>
    %43 = vector.shape_cast %42 : vector<1x1x128xf32> to vector<1x128xf32>
    %44 = vector.broadcast %43 : vector<1x128xf32> to vector<8x128xf32>
    %45 = arith.addf %41, %44 : vector<8x128xf32>
    %cst_26 = arith.constant 0.00999999977 : f32
    %46 = vector.broadcast %cst_26 : f32 to vector<8x128xf32>
    %47 = arith.mulf %46, %45 : vector<8x128xf32>
    %48 = arith.maximumf %45, %47 : vector<8x128xf32>
    %cst_27 = arith.constant dense<0.000000e+00> : vector<128xf32>
    %49 = vector.multi_reduction <add>, %48, %cst_27 [0] : vector<8x128xf32> to vector<128xf32>
    %50 = vector.shape_cast %49 : vector<128xf32> to vector<1x128xf32>
    %51 = arith.mulf %48, %48 : vector<8x128xf32>
    %cst_28 = arith.constant dense<0.000000e+00> : vector<128xf32>
    %52 = vector.multi_reduction <add>, %51, %cst_28 [0] : vector<8x128xf32> to vector<128xf32>
    %53 = vector.shape_cast %52 : vector<128xf32> to vector<1x128xf32>
    %cst_29 = arith.constant 1.250000e-01 : f32
    %54 = vector.broadcast %cst_29 : f32 to vector<1x128xf32>
    %55 = arith.mulf %50, %54 : vector<1x128xf32>
    %cst_30 = arith.constant 1.250000e-01 : f32
    %56 = vector.broadcast %cst_30 : f32 to vector<1x128xf32>
    %57 = arith.mulf %53, %56 : vector<1x128xf32>
    %58 = arith.mulf %55, %55 : vector<1x128xf32>
    %59 = arith.subf %57, %58 : vector<1x128xf32>
    %cst_31 = arith.constant 0.000000e+00 : f32
    %60 = vector.broadcast %cst_31 : f32 to vector<1x128xf32>
    %61 = arith.maximumf %59, %60 : vector<1x128xf32>
    %62 = vector.broadcast %55 : vector<1x128xf32> to vector<8x128xf32>
    %63 = arith.subf %48, %62 : vector<8x128xf32>
    %cst_32 = arith.constant 9.99999974E-6 : f32
    %64 = vector.broadcast %cst_32 : f32 to vector<1x128xf32>
    %65 = arith.addf %61, %64 : vector<1x128xf32>
    %66 = math.rsqrt %65 : vector<1x128xf32>
    %67 = vector.broadcast %66 : vector<1x128xf32> to vector<8x128xf32>
    %68 = arith.mulf %63, %67 : vector<8x128xf32>
    %c1_33 = arith.constant 1 : index
    %c0_34 = arith.constant 0 : index
    %c0_35 = arith.constant 0 : index
    %69 = vector.load %arg3[%c1_33, %c0_34, %c0_35] : memref<6x1x128xf32, #tpu.memory_space<vmem>>, vector<1x1x128xf32>
    %70 = vector.shape_cast %69 : vector<1x1x128xf32> to vector<1x128xf32>
    %71 = vector.broadcast %70 : vector<1x128xf32> to vector<8x128xf32>
    %72 = arith.mulf %68, %71 : vector<8x128xf32>
    %c1_36 = arith.constant 1 : index
    %c0_37 = arith.constant 0 : index
    %c0_38 = arith.constant 0 : index
    %73 = vector.load %arg4[%c1_36, %c0_37, %c0_38] : memref<6x1x128xf32, #tpu.memory_space<vmem>>, vector<1x1x128xf32>
    %74 = vector.shape_cast %73 : vector<1x1x128xf32> to vector<1x128xf32>
    %75 = vector.broadcast %74 : vector<1x128xf32> to vector<8x128xf32>
    %76 = arith.addf %72, %75 : vector<8x128xf32>
    %c2 = arith.constant 2 : index
    %c0_39 = arith.constant 0 : index
    %c0_40 = arith.constant 0 : index
    %77 = vector.load %arg1[%c2, %c0_39, %c0_40] : memref<6x128x128xf32, #tpu.memory_space<vmem>>, vector<1x128x128xf32>
    %78 = vector.shape_cast %77 : vector<1x128x128xf32> to vector<128x128xf32>
    %cst_41 = arith.constant dense<0.000000e+00> : vector<8x128xf32>
    %79 = tpu.matmul %76, %78, %cst_41 {dimension_numbers = #tpu.dot_dimension_numbers<[1], [0], [0], [1], [0, 0, 1, 1], [], []>} : vector<8x128xf32>, vector<128x128xf32>, vector<8x128xf32> -> vector<8x128xf32>
    %c2_42 = arith.constant 2 : index
    %c0_43 = arith.constant 0 : index
    %c0_44 = arith.constant 0 : index
    %80 = vector.load %arg2[%c2_42, %c0_43, %c0_44] : memref<6x1x128xf32, #tpu.memory_space<vmem>>, vector<1x1x128xf32>
    %81 = vector.shape_cast %80 : vector<1x1x128xf32> to vector<1x128xf32>
    %82 = vector.broadcast %81 : vector<1x128xf32> to vector<8x128xf32>
    %83 = arith.addf %79, %82 : vector<8x128xf32>
    %cst_45 = arith.constant 0.00999999977 : f32
    %84 = vector.broadcast %cst_45 : f32 to vector<8x128xf32>
    %85 = arith.mulf %84, %83 : vector<8x128xf32>
    %86 = arith.maximumf %83, %85 : vector<8x128xf32>
    %cst_46 = arith.constant dense<0.000000e+00> : vector<128xf32>
    %87 = vector.multi_reduction <add>, %86, %cst_46 [0] : vector<8x128xf32> to vector<128xf32>
    %88 = vector.shape_cast %87 : vector<128xf32> to vector<1x128xf32>
    %89 = arith.mulf %86, %86 : vector<8x128xf32>
    %cst_47 = arith.constant dense<0.000000e+00> : vector<128xf32>
    %90 = vector.multi_reduction <add>, %89, %cst_47 [0] : vector<8x128xf32> to vector<128xf32>
    %91 = vector.shape_cast %90 : vector<128xf32> to vector<1x128xf32>
    %cst_48 = arith.constant 1.250000e-01 : f32
    %92 = vector.broadcast %cst_48 : f32 to vector<1x128xf32>
    %93 = arith.mulf %88, %92 : vector<1x128xf32>
    %cst_49 = arith.constant 1.250000e-01 : f32
    %94 = vector.broadcast %cst_49 : f32 to vector<1x128xf32>
    %95 = arith.mulf %91, %94 : vector<1x128xf32>
    %96 = arith.mulf %93, %93 : vector<1x128xf32>
    %97 = arith.subf %95, %96 : vector<1x128xf32>
    %cst_50 = arith.constant 0.000000e+00 : f32
    %98 = vector.broadcast %cst_50 : f32 to vector<1x128xf32>
    %99 = arith.maximumf %97, %98 : vector<1x128xf32>
    %100 = vector.broadcast %93 : vector<1x128xf32> to vector<8x128xf32>
    %101 = arith.subf %86, %100 : vector<8x128xf32>
    %cst_51 = arith.constant 9.99999974E-6 : f32
    %102 = vector.broadcast %cst_51 : f32 to vector<1x128xf32>
    %103 = arith.addf %99, %102 : vector<1x128xf32>
    %104 = math.rsqrt %103 : vector<1x128xf32>
    %105 = vector.broadcast %104 : vector<1x128xf32> to vector<8x128xf32>
    %106 = arith.mulf %101, %105 : vector<8x128xf32>
    %c2_52 = arith.constant 2 : index
    %c0_53 = arith.constant 0 : index
    %c0_54 = arith.constant 0 : index
    %107 = vector.load %arg3[%c2_52, %c0_53, %c0_54] : memref<6x1x128xf32, #tpu.memory_space<vmem>>, vector<1x1x128xf32>
    %108 = vector.shape_cast %107 : vector<1x1x128xf32> to vector<1x128xf32>
    %109 = vector.broadcast %108 : vector<1x128xf32> to vector<8x128xf32>
    %110 = arith.mulf %106, %109 : vector<8x128xf32>
    %c2_55 = arith.constant 2 : index
    %c0_56 = arith.constant 0 : index
    %c0_57 = arith.constant 0 : index
    %111 = vector.load %arg4[%c2_55, %c0_56, %c0_57] : memref<6x1x128xf32, #tpu.memory_space<vmem>>, vector<1x1x128xf32>
    %112 = vector.shape_cast %111 : vector<1x1x128xf32> to vector<1x128xf32>
    %113 = vector.broadcast %112 : vector<1x128xf32> to vector<8x128xf32>
    %114 = arith.addf %110, %113 : vector<8x128xf32>
    %c3 = arith.constant 3 : index
    %c0_58 = arith.constant 0 : index
    %c0_59 = arith.constant 0 : index
    %115 = vector.load %arg1[%c3, %c0_58, %c0_59] : memref<6x128x128xf32, #tpu.memory_space<vmem>>, vector<1x128x128xf32>
    %116 = vector.shape_cast %115 : vector<1x128x128xf32> to vector<128x128xf32>
    %cst_60 = arith.constant dense<0.000000e+00> : vector<8x128xf32>
    %117 = tpu.matmul %114, %116, %cst_60 {dimension_numbers = #tpu.dot_dimension_numbers<[1], [0], [0], [1], [0, 0, 1, 1], [], []>} : vector<8x128xf32>, vector<128x128xf32>, vector<8x128xf32> -> vector<8x128xf32>
    %c3_61 = arith.constant 3 : index
    %c0_62 = arith.constant 0 : index
    %c0_63 = arith.constant 0 : index
    %118 = vector.load %arg2[%c3_61, %c0_62, %c0_63] : memref<6x1x128xf32, #tpu.memory_space<vmem>>, vector<1x1x128xf32>
    %119 = vector.shape_cast %118 : vector<1x1x128xf32> to vector<1x128xf32>
    %120 = vector.broadcast %119 : vector<1x128xf32> to vector<8x128xf32>
    %121 = arith.addf %117, %120 : vector<8x128xf32>
    %cst_64 = arith.constant 0.00999999977 : f32
    %122 = vector.broadcast %cst_64 : f32 to vector<8x128xf32>
    %123 = arith.mulf %122, %121 : vector<8x128xf32>
    %124 = arith.maximumf %121, %123 : vector<8x128xf32>
    %cst_65 = arith.constant dense<0.000000e+00> : vector<128xf32>
    %125 = vector.multi_reduction <add>, %124, %cst_65 [0] : vector<8x128xf32> to vector<128xf32>
    %126 = vector.shape_cast %125 : vector<128xf32> to vector<1x128xf32>
    %127 = arith.mulf %124, %124 : vector<8x128xf32>
    %cst_66 = arith.constant dense<0.000000e+00> : vector<128xf32>
    %128 = vector.multi_reduction <add>, %127, %cst_66 [0] : vector<8x128xf32> to vector<128xf32>
    %129 = vector.shape_cast %128 : vector<128xf32> to vector<1x128xf32>
    %cst_67 = arith.constant 1.250000e-01 : f32
    %130 = vector.broadcast %cst_67 : f32 to vector<1x128xf32>
    %131 = arith.mulf %126, %130 : vector<1x128xf32>
    %cst_68 = arith.constant 1.250000e-01 : f32
    %132 = vector.broadcast %cst_68 : f32 to vector<1x128xf32>
    %133 = arith.mulf %129, %132 : vector<1x128xf32>
    %134 = arith.mulf %131, %131 : vector<1x128xf32>
    %135 = arith.subf %133, %134 : vector<1x128xf32>
    %cst_69 = arith.constant 0.000000e+00 : f32
    %136 = vector.broadcast %cst_69 : f32 to vector<1x128xf32>
    %137 = arith.maximumf %135, %136 : vector<1x128xf32>
    %138 = vector.broadcast %131 : vector<1x128xf32> to vector<8x128xf32>
    %139 = arith.subf %124, %138 : vector<8x128xf32>
    %cst_70 = arith.constant 9.99999974E-6 : f32
    %140 = vector.broadcast %cst_70 : f32 to vector<1x128xf32>
    %141 = arith.addf %137, %140 : vector<1x128xf32>
    %142 = math.rsqrt %141 : vector<1x128xf32>
    %143 = vector.broadcast %142 : vector<1x128xf32> to vector<8x128xf32>
    %144 = arith.mulf %139, %143 : vector<8x128xf32>
    %c3_71 = arith.constant 3 : index
    %c0_72 = arith.constant 0 : index
    %c0_73 = arith.constant 0 : index
    %145 = vector.load %arg3[%c3_71, %c0_72, %c0_73] : memref<6x1x128xf32, #tpu.memory_space<vmem>>, vector<1x1x128xf32>
    %146 = vector.shape_cast %145 : vector<1x1x128xf32> to vector<1x128xf32>
    %147 = vector.broadcast %146 : vector<1x128xf32> to vector<8x128xf32>
    %148 = arith.mulf %144, %147 : vector<8x128xf32>
    %c3_74 = arith.constant 3 : index
    %c0_75 = arith.constant 0 : index
    %c0_76 = arith.constant 0 : index
    %149 = vector.load %arg4[%c3_74, %c0_75, %c0_76] : memref<6x1x128xf32, #tpu.memory_space<vmem>>, vector<1x1x128xf32>
    %150 = vector.shape_cast %149 : vector<1x1x128xf32> to vector<1x128xf32>
    %151 = vector.broadcast %150 : vector<1x128xf32> to vector<8x128xf32>
    %152 = arith.addf %148, %151 : vector<8x128xf32>
    %c4 = arith.constant 4 : index
    %c0_77 = arith.constant 0 : index
    %c0_78 = arith.constant 0 : index
    %153 = vector.load %arg1[%c4, %c0_77, %c0_78] : memref<6x128x128xf32, #tpu.memory_space<vmem>>, vector<1x128x128xf32>
    %154 = vector.shape_cast %153 : vector<1x128x128xf32> to vector<128x128xf32>
    %cst_79 = arith.constant dense<0.000000e+00> : vector<8x128xf32>
    %155 = tpu.matmul %152, %154, %cst_79 {dimension_numbers = #tpu.dot_dimension_numbers<[1], [0], [0], [1], [0, 0, 1, 1], [], []>} : vector<8x128xf32>, vector<128x128xf32>, vector<8x128xf32> -> vector<8x128xf32>
    %c4_80 = arith.constant 4 : index
    %c0_81 = arith.constant 0 : index
    %c0_82 = arith.constant 0 : index
    %156 = vector.load %arg2[%c4_80, %c0_81, %c0_82] : memref<6x1x128xf32, #tpu.memory_space<vmem>>, vector<1x1x128xf32>
    %157 = vector.shape_cast %156 : vector<1x1x128xf32> to vector<1x128xf32>
    %158 = vector.broadcast %157 : vector<1x128xf32> to vector<8x128xf32>
    %159 = arith.addf %155, %158 : vector<8x128xf32>
    %cst_83 = arith.constant 0.00999999977 : f32
    %160 = vector.broadcast %cst_83 : f32 to vector<8x128xf32>
    %161 = arith.mulf %160, %159 : vector<8x128xf32>
    %162 = arith.maximumf %159, %161 : vector<8x128xf32>
    %cst_84 = arith.constant dense<0.000000e+00> : vector<128xf32>
    %163 = vector.multi_reduction <add>, %162, %cst_84 [0] : vector<8x128xf32> to vector<128xf32>
    %164 = vector.shape_cast %163 : vector<128xf32> to vector<1x128xf32>
    %165 = arith.mulf %162, %162 : vector<8x128xf32>
    %cst_85 = arith.constant dense<0.000000e+00> : vector<128xf32>
    %166 = vector.multi_reduction <add>, %165, %cst_85 [0] : vector<8x128xf32> to vector<128xf32>
    %167 = vector.shape_cast %166 : vector<128xf32> to vector<1x128xf32>
    %cst_86 = arith.constant 1.250000e-01 : f32
    %168 = vector.broadcast %cst_86 : f32 to vector<1x128xf32>
    %169 = arith.mulf %164, %168 : vector<1x128xf32>
    %cst_87 = arith.constant 1.250000e-01 : f32
    %170 = vector.broadcast %cst_87 : f32 to vector<1x128xf32>
    %171 = arith.mulf %167, %170 : vector<1x128xf32>
    %172 = arith.mulf %169, %169 : vector<1x128xf32>
    %173 = arith.subf %171, %172 : vector<1x128xf32>
    %cst_88 = arith.constant 0.000000e+00 : f32
    %174 = vector.broadcast %cst_88 : f32 to vector<1x128xf32>
    %175 = arith.maximumf %173, %174 : vector<1x128xf32>
    %176 = vector.broadcast %169 : vector<1x128xf32> to vector<8x128xf32>
    %177 = arith.subf %162, %176 : vector<8x128xf32>
    %cst_89 = arith.constant 9.99999974E-6 : f32
    %178 = vector.broadcast %cst_89 : f32 to vector<1x128xf32>
    %179 = arith.addf %175, %178 : vector<1x128xf32>
    %180 = math.rsqrt %179 : vector<1x128xf32>
    %181 = vector.broadcast %180 : vector<1x128xf32> to vector<8x128xf32>
    %182 = arith.mulf %177, %181 : vector<8x128xf32>
    %c4_90 = arith.constant 4 : index
    %c0_91 = arith.constant 0 : index
    %c0_92 = arith.constant 0 : index
    %183 = vector.load %arg3[%c4_90, %c0_91, %c0_92] : memref<6x1x128xf32, #tpu.memory_space<vmem>>, vector<1x1x128xf32>
    %184 = vector.shape_cast %183 : vector<1x1x128xf32> to vector<1x128xf32>
    %185 = vector.broadcast %184 : vector<1x128xf32> to vector<8x128xf32>
    %186 = arith.mulf %182, %185 : vector<8x128xf32>
    %c4_93 = arith.constant 4 : index
    %c0_94 = arith.constant 0 : index
    %c0_95 = arith.constant 0 : index
    %187 = vector.load %arg4[%c4_93, %c0_94, %c0_95] : memref<6x1x128xf32, #tpu.memory_space<vmem>>, vector<1x1x128xf32>
    %188 = vector.shape_cast %187 : vector<1x1x128xf32> to vector<1x128xf32>
    %189 = vector.broadcast %188 : vector<1x128xf32> to vector<8x128xf32>
    %190 = arith.addf %186, %189 : vector<8x128xf32>
    %c5 = arith.constant 5 : index
    %c0_96 = arith.constant 0 : index
    %c0_97 = arith.constant 0 : index
    %191 = vector.load %arg1[%c5, %c0_96, %c0_97] : memref<6x128x128xf32, #tpu.memory_space<vmem>>, vector<1x128x128xf32>
    %192 = vector.shape_cast %191 : vector<1x128x128xf32> to vector<128x128xf32>
    %cst_98 = arith.constant dense<0.000000e+00> : vector<8x128xf32>
    %193 = tpu.matmul %190, %192, %cst_98 {dimension_numbers = #tpu.dot_dimension_numbers<[1], [0], [0], [1], [0, 0, 1, 1], [], []>} : vector<8x128xf32>, vector<128x128xf32>, vector<8x128xf32> -> vector<8x128xf32>
    %c5_99 = arith.constant 5 : index
    %c0_100 = arith.constant 0 : index
    %c0_101 = arith.constant 0 : index
    %194 = vector.load %arg2[%c5_99, %c0_100, %c0_101] : memref<6x1x128xf32, #tpu.memory_space<vmem>>, vector<1x1x128xf32>
    %195 = vector.shape_cast %194 : vector<1x1x128xf32> to vector<1x128xf32>
    %196 = vector.broadcast %195 : vector<1x128xf32> to vector<8x128xf32>
    %197 = arith.addf %193, %196 : vector<8x128xf32>
    %cst_102 = arith.constant 0.00999999977 : f32
    %198 = vector.broadcast %cst_102 : f32 to vector<8x128xf32>
    %199 = arith.mulf %198, %197 : vector<8x128xf32>
    %200 = arith.maximumf %197, %199 : vector<8x128xf32>
    %cst_103 = arith.constant dense<0.000000e+00> : vector<128xf32>
    %201 = vector.multi_reduction <add>, %200, %cst_103 [0] : vector<8x128xf32> to vector<128xf32>
    %202 = vector.shape_cast %201 : vector<128xf32> to vector<1x128xf32>
    %203 = arith.mulf %200, %200 : vector<8x128xf32>
    %cst_104 = arith.constant dense<0.000000e+00> : vector<128xf32>
    %204 = vector.multi_reduction <add>, %203, %cst_104 [0] : vector<8x128xf32> to vector<128xf32>
    %205 = vector.shape_cast %204 : vector<128xf32> to vector<1x128xf32>
    %cst_105 = arith.constant 1.250000e-01 : f32
    %206 = vector.broadcast %cst_105 : f32 to vector<1x128xf32>
    %207 = arith.mulf %202, %206 : vector<1x128xf32>
    %cst_106 = arith.constant 1.250000e-01 : f32
    %208 = vector.broadcast %cst_106 : f32 to vector<1x128xf32>
    %209 = arith.mulf %205, %208 : vector<1x128xf32>
    %210 = arith.mulf %207, %207 : vector<1x128xf32>
    %211 = arith.subf %209, %210 : vector<1x128xf32>
    %cst_107 = arith.constant 0.000000e+00 : f32
    %212 = vector.broadcast %cst_107 : f32 to vector<1x128xf32>
    %213 = arith.maximumf %211, %212 : vector<1x128xf32>
    %214 = vector.broadcast %207 : vector<1x128xf32> to vector<8x128xf32>
    %215 = arith.subf %200, %214 : vector<8x128xf32>
    %cst_108 = arith.constant 9.99999974E-6 : f32
    %216 = vector.broadcast %cst_108 : f32 to vector<1x128xf32>
    %217 = arith.addf %213, %216 : vector<1x128xf32>
    %218 = math.rsqrt %217 : vector<1x128xf32>
    %219 = vector.broadcast %218 : vector<1x128xf32> to vector<8x128xf32>
    %220 = arith.mulf %215, %219 : vector<8x128xf32>
    %c5_109 = arith.constant 5 : index
    %c0_110 = arith.constant 0 : index
    %c0_111 = arith.constant 0 : index
    %221 = vector.load %arg3[%c5_109, %c0_110, %c0_111] : memref<6x1x128xf32, #tpu.memory_space<vmem>>, vector<1x1x128xf32>
    %222 = vector.shape_cast %221 : vector<1x1x128xf32> to vector<1x128xf32>
    %223 = vector.broadcast %222 : vector<1x128xf32> to vector<8x128xf32>
    %224 = arith.mulf %220, %223 : vector<8x128xf32>
    %c5_112 = arith.constant 5 : index
    %c0_113 = arith.constant 0 : index
    %c0_114 = arith.constant 0 : index
    %225 = vector.load %arg4[%c5_112, %c0_113, %c0_114] : memref<6x1x128xf32, #tpu.memory_space<vmem>>, vector<1x1x128xf32>
    %226 = vector.shape_cast %225 : vector<1x1x128xf32> to vector<1x128xf32>
    %227 = vector.broadcast %226 : vector<1x128xf32> to vector<8x128xf32>
    %228 = arith.addf %224, %227 : vector<8x128xf32>
    %c0_115 = arith.constant 0 : index
    %c0_116 = arith.constant 0 : index
    %229 = vector.load %arg5[%c0_115, %c0_116] : memref<8x128xf32, #tpu.memory_space<vmem>>, vector<8x128xf32>
    tpu.vector_store %arg5[%c0_115, %c0_116], %228 {strides = array<i32>} : memref<8x128xf32, #tpu.memory_space<vmem>>, vector<8x128xf32>,
    return
  }
}

</mosaic_0001>

<llo_original>
// kernel: autoencoder_forward_pallas.1
$region0: #{autoencoder_forward_pallas.1}
  #allocation0 [shape = 'u32[]', space=smem, size = 0x4, offset = 0x4, fixed_abs, tag = 'smem constant byte address 0x4 - core index']
  #allocation1 [shape = 'u32[72,128]{1,0:T(1,128)}', space=vmem, size = 0x9000, scoped, tag = 'internal scratch']
  %s0 = inlined_call_operand.hbm [shape: f32[8,128], index: 0, kind: input, shape index: {}]
  %s1 = inlined_call_operand.hbm [shape: f32[6,128,128], index: 1, kind: input, shape index: {}]
  %s2 = inlined_call_operand.hbm [shape: f32[6,1,128], index: 2, kind: input, shape index: {}]
  %s3 = inlined_call_operand.hbm [shape: f32[6,1,128], index: 3, kind: input, shape index: {}]
  %s4 = inlined_call_operand.hbm [shape: f32[6,1,128], index: 4, kind: input, shape index: {}]
  %s5 = inlined_call_operand.hbm [shape: f32[8,128], index: 5, kind: output, shape index: {}]
  %s6 = sld [smem:[#allocation0]]
  $region50: #{autoencoder_forward_pallas.1} parent=0
    _
  %s8 = ssub.s32 1, %s6
  %s9 = scalar_select 0, %s8, %s6
  $region1: #{autoencoder_forward_pallas.1} parent=0
    #allocation2 [shape = 'u8[4096]{0}', space=vmem, size = 0x1000, scoped, tag = 'input window, operand 0, single buffered']
    #allocation3 [shape = 's32[1]{0}', space=sflag, size = 0x4, scoped, tag = 'scoped memory for autoencoder_forward_pallas.1']
    #allocation4 [shape = 's32[1]{0}', space=sflag, size = 0x4, scoped, tag = 'scoped memory for autoencoder_forward_pallas.1']
    #allocation5 [shape = 'u8[393216]{0}', space=vmem, size = 0x60000, scoped, tag = 'input window, operand 1, single buffered']
    #allocation6 [shape = 's32[1]{0}', space=sflag, size = 0x4, scoped, tag = 'scoped memory for autoencoder_forward_pallas.1']
    #allocation7 [shape = 'u8[3072]{0}', space=vmem, size = 0xc00, scoped, tag = 'input window, operand 2, single buffered']
    #allocation8 [shape = 'u8[3072]{0}', space=vmem, size = 0xc00, scoped, tag = 'input window, operand 3, single buffered']
    #allocation9 [shape = 's32[1]{0}', space=sflag, size = 0x4, scoped, tag = 'scoped memory for autoencoder_forward_pallas.1']
    #allocation10 [shape = 'u8[3072]{0}', space=vmem, size = 0xc00, scoped, tag = 'input window, operand 4, single buffered']
    #allocation11 [shape = 'u8[4096]{0}', space=vmem, size = 0x1000, scoped, tag = 'output window, operand 0, single buffered']
    %10 = vsyncpa [#allocation3], 0
    %11 = vsyncpa [#allocation6], 0
    %12 = vsyncpa [#allocation9], 0
    %13 = vsyncpa [#allocation4], 0
    // Predicated region
    $region2: #{autoencoder_forward_pallas.1} parent=1 // pred_check
      _
    $region3: #{autoencoder_forward_pallas.1} parent=1 // pred_check_branch
      %15 = sbr.rel (0) target = $region5
    $region4: #{autoencoder_forward_pallas.1} parent=1 // pred_region
      %17 = vsyncadd [#allocation3], 0
      %s19 = sshll.u32 %s0, 4
      %s20 = int_to_ptr.hbm [resolvable:$true] %s19
      %s21 = sshll.u32 [#allocation2], 4
      %s22 = int_to_ptr.vmem [resolvable:$true] %s21
      %24 = dma.hbm_to_vmem [thread:$0]  %s20, 128, %s22, [#allocation3]
    $region5: #{autoencoder_forward_pallas.1} parent=1 // pred_fallthru
      _
    // Predicated region
    $region6: #{autoencoder_forward_pallas.1} parent=1 // pred_check
      _
    $region7: #{autoencoder_forward_pallas.1} parent=1 // pred_check_branch
      %26 = sbr.rel (0) target = $region9
    $region8: #{autoencoder_forward_pallas.1} parent=1 // pred_region
      %28 = vsyncadd [#allocation6], 0
      %s29 = sshll.u32 %s1, 4
      %s30 = int_to_ptr.hbm [resolvable:$true] %s29
      %s31 = sshll.u32 [#allocation5], 4
      %s32 = int_to_ptr.vmem [resolvable:$true] %s31
      %37 = dma.hbm_to_vmem [thread:$0]  %s30, 12288, %s32, [#allocation6], 128, 128, 8
    $region9: #{autoencoder_forward_pallas.1} parent=1 // pred_fallthru
      _
    // Predicated region
    $region10: #{autoencoder_forward_pallas.1} parent=1 // pred_check
      _
    $region11: #{autoencoder_forward_pallas.1} parent=1 // pred_check_branch
      %39 = sbr.rel (0) target = $region13
    $region12: #{autoencoder_forward_pallas.1} parent=1 // pred_region
      %41 = vsyncadd [#allocation6], 0
      %s42 = sshll.u32 %s2, 4
      %s43 = int_to_ptr.hbm [resolvable:$true] %s42
      %s44 = sshll.u32 [#allocation7], 4
      %s45 = int_to_ptr.vmem [resolvable:$true] %s44
      %50 = dma.hbm_to_vmem [thread:$0]  %s43, 96, %s45, [#allocation6], 16, 16, 1
    $region13: #{autoencoder_forward_pallas.1} parent=1 // pred_fallthru
      _
    // Predicated region
    $region14: #{autoencoder_forward_pallas.1} parent=1 // pred_check
      _
    $region15: #{autoencoder_forward_pallas.1} parent=1 // pred_check_branch
      %52 = sbr.rel (0) target = $region17
    $region16: #{autoencoder_forward_pallas.1} parent=1 // pred_region
      %54 = vsyncadd [#allocation9], 0
      %s55 = sshll.u32 %s3, 4
      %s56 = int_to_ptr.hbm [resolvable:$true] %s55
      %s57 = sshll.u32 [#allocation8], 4
      %s58 = int_to_ptr.vmem [resolvable:$true] %s57
      %63 = dma.hbm_to_vmem [thread:$0]  %s56, 96, %s58, [#allocation9], 16, 16, 1
    $region17: #{autoencoder_forward_pallas.1} parent=1 // pred_fallthru
      _
    // Predicated region
    $region18: #{autoencoder_forward_pallas.1} parent=1 // pred_check
      _
    $region19: #{autoencoder_forward_pallas.1} parent=1 // pred_check_branch
      %65 = sbr.rel (0) target = $region21
    $region20: #{autoencoder_forward_pallas.1} parent=1 // pred_region
      %67 = vsyncadd [#allocation9], 0
      %s68 = sshll.u32 %s4, 4
      %s69 = int_to_ptr.hbm [resolvable:$true] %s68
      %s70 = sshll.u32 [#allocation10], 4
      %s71 = int_to_ptr.vmem [resolvable:$true] %s70
      %76 = dma.hbm_to_vmem [thread:$0]  %s69, 96, %s71, [#allocation9], 16, 16, 1
    $region21: #{autoencoder_forward_pallas.1} parent=1 // pred_fallthru
      _
    // Predicated region
    $region22: #{autoencoder_forward_pallas.1} parent=1 // pred_check
      _
    $region23: #{autoencoder_forward_pallas.1} parent=1 // pred_check_branch
      %78 = sbr.rel (0) target = $region25
    $region24: #{autoencoder_forward_pallas.1} parent=1 // pred_region
      %80 = dma.done [#allocation3], 128
    $region25: #{autoencoder_forward_pallas.1} parent=1 // pred_fallthru
      _
    // Predicated region
    $region26: #{autoencoder_forward_pallas.1} parent=1 // pred_check
      _
    $region27: #{autoencoder_forward_pallas.1} parent=1 // pred_check_branch
      %82 = sbr.rel (0) target = $region29
    $region28: #{autoencoder_forward_pallas.1} parent=1 // pred_region
      %84 = dma.done [#allocation6], 12288
    $region29: #{autoencoder_forward_pallas.1} parent=1 // pred_fallthru
      _
    // Predicated region
    $region30: #{autoencoder_forward_pallas.1} parent=1 // pred_check
      _
    $region31: #{autoencoder_forward_pallas.1} parent=1 // pred_check_branch
      %86 = sbr.rel (0) target = $region33
    $region32: #{autoencoder_forward_pallas.1} parent=1 // pred_region
      %88 = dma.done [#allocation6], 96
    $region33: #{autoencoder_forward_pallas.1} parent=1 // pred_fallthru
      _
    // Predicated region
    $region34: #{autoencoder_forward_pallas.1} parent=1 // pred_check
      _
    $region35: #{autoencoder_forward_pallas.1} parent=1 // pred_check_branch
      %90 = sbr.rel (0) target = $region37
    $region36: #{autoencoder_forward_pallas.1} parent=1 // pred_region
      %92 = dma.done [#allocation9], 96
    $region37: #{autoencoder_forward_pallas.1} parent=1 // pred_fallthru
      _
    // Predicated region
    $region38: #{autoencoder_forward_pallas.1} parent=1 // pred_check
      _
    $region39: #{autoencoder_forward_pallas.1} parent=1 // pred_check_branch
      %94 = sbr.rel (0) target = $region41
    $region40: #{autoencoder_forward_pallas.1} parent=1 // pred_region
      %96 = dma.done [#allocation9], 96
    $region41: #{autoencoder_forward_pallas.1} parent=1 // pred_fallthru
      _
    %v97 = vld [vmem:[#allocation2] sm:$0xff]
    %v98 = vld [vmem:[#allocation5] sm:$0xff]
    %v99 = vld [vmem:[#allocation5 + $0x8] sm:$0xff]
    %v100 = vld [vmem:[#allocation5 + $0x10] sm:$0xff]
    %v101 = vld [vmem:[#allocation5 + $0x18] sm:$0xff]
    %v102 = vld [vmem:[#allocation5 + $0x20] sm:$0xff]
    %v103 = vld [vmem:[#allocation5 + $0x28] sm:$0xff]
    %v104 = vld [vmem:[#allocation5 + $0x30] sm:$0xff]
    %v105 = vld [vmem:[#allocation5 + $0x38] sm:$0xff]
    %v106 = vld [vmem:[#allocation5 + $0x40] sm:$0xff]
    %v107 = vld [vmem:[#allocation5 + $0x48] sm:$0xff]
    %v108 = vld [vmem:[#allocation5 + $0x50] sm:$0xff]
    %v109 = vld [vmem:[#allocation5 + $0x58] sm:$0xff]
    %v110 = vld [vmem:[#allocation5 + $0x60] sm:$0xff]
    %v111 = vld [vmem:[#allocation5 + $0x68] sm:$0xff]
    %v112 = vld [vmem:[#allocation5 + $0x70] sm:$0xff]
    %v113 = vld [vmem:[#allocation5 + $0x78] sm:$0xff]
    %v114 = vld [vmem:[#allocation7] sm:$0x1]
    %v116 = vperm.slane %v114, 0
    %118 = vmatpush.msra.mxu0 %v113
    %119 = vmatpush.msra.mxu0 %v112
    %120 = vmatpush.msra.mxu0 %v111
    %121 = vmatpush.msra.mxu0 %v110
    %122 = vmatpush.msra.mxu0 %v109
    %123 = vmatpush.msra.mxu0 %v108
    %124 = vmatpush.msra.mxu0 %v107
    %125 = vmatpush.msra.mxu0 %v106
    %126 = vmatpush.msra.mxu0 %v105
    %127 = vmatpush.msra.mxu0 %v104
    %128 = vmatpush.msra.mxu0 %v103
    %129 = vmatpush.msra.mxu0 %v102
    %130 = vmatpush.msra.mxu0 %v101
    %131 = vmatpush.msra.mxu0 %v100
    %132 = vmatpush.msra.mxu0 %v99
    %133 = vmatpush.msra.mxu0 %v98
    %134 = vmatmul.f32.gmra.mxu0 %v97
    %v135 = vpop.f32.mrf.mxu0
    %v136 = vadd.f32 %v116, %v135
    %137 = vdwg.mxu0
    %v138 = vmul.f32 %v136, 0.01
    %v139 = vmax.f32 %v136, %v138
    %v140 = vrot.slane %v139, 4
    %v141 = vadd.f32 %v139, %v140
    %v142 = vrot.slane %v141, 2
    %v143 = vadd.f32 %v141, %v142
    %v144 = vrot.slane %v143, 1
    %v145 = vadd.f32 %v143, %v144
    %v146 = vmul.f32 %v139, %v139
    %v147 = vrot.slane %v146, 4
    %v148 = vadd.f32 %v146, %v147
    %v149 = vrot.slane %v148, 2
    %v150 = vadd.f32 %v148, %v149
    %v151 = vrot.slane %v150, 1
    %v152 = vadd.f32 %v150, %v151
    %v153 = vmul.f32 %v145, 0.125
    %v154 = vmul.f32 %v152, 0.125
    %v155 = vmul.f32 %v153, %v153
    %v156 = vsub.f32 %v154, %v155
    %v157 = vmax.f32 %v156, 0.0
    %v158 = vsub.f32 %v139, %v153
    %v159 = vadd.f32 %v157, 1e-05
    %v160 = vrsqrt.pop %v159
    %v161 = vmul.f32 %v160, %v159
    %v162 = vmul.f32 %v161, %v160
    %v163 = vmul.f32 0.5, %v162
    %v164 = vsub.f32 1.5, %v163
    %v165 = vmul.f32 %v160, %v164
    %vm166 = vweird.f32 %v159
    %vm167 = vweird.f32 %v160
    %vm168 = vmor %vm166, %vm167
    %v169 = vsel %vm168, %v160, %v165
    %v170 = vmul.f32 %v158, %v169
    %v171 = vld [vmem:[#allocation8] sm:$0x1]
    %v173 = vperm.slane %v171, 0
    %v175 = vmul.f32 %v170, %v173
    %v176 = vld [vmem:[#allocation10] sm:$0x1]
    %v178 = vperm.slane %v176, 0
    %v180 = vadd.f32 %v175, %v178
    %s181 = scalar_lea.vmem [#allocation5], 128
    %v182 = vld [vmem:[%s181] sm:$0xff]
    %v183 = vld [vmem:[%s181 + $0x8] sm:$0xff]
    %v184 = vld [vmem:[%s181 + $0x10] sm:$0xff]
    %v185 = vld [vmem:[%s181 + $0x18] sm:$0xff]
    %v186 = vld [vmem:[%s181 + $0x20] sm:$0xff]
    %v187 = vld [vmem:[%s181 + $0x28] sm:$0xff]
    %v188 = vld [vmem:[%s181 + $0x30] sm:$0xff]
    %v189 = vld [vmem:[%s181 + $0x38] sm:$0xff]
    %v190 = vld [vmem:[%s181 + $0x40] sm:$0xff]
    %v191 = vld [vmem:[%s181 + $0x48] sm:$0xff]
    %v192 = vld [vmem:[%s181 + $0x50] sm:$0xff]
    %v193 = vld [vmem:[%s181 + $0x58] sm:$0xff]
    %v194 = vld [vmem:[%s181 + $0x60] sm:$0xff]
    %v195 = vld [vmem:[%s181 + $0x68] sm:$0xff]
    %v196 = vld [vmem:[%s181 + $0x70] sm:$0xff]
    %v197 = vld [vmem:[%s181 + $0x78] sm:$0xff]
    %s198 = scalar_lea.vmem [#allocation7], 1
    %v199 = vld [vmem:[%s198] sm:$0x1]
    %v201 = vperm.slane %v199, 0
    %203 = vmatpush.msra.mxu0 %v197
    %204 = vmatpush.msra.mxu0 %v196
    %205 = vmatpush.msra.mxu0 %v195
    %206 = vmatpush.msra.mxu0 %v194
    %207 = vmatpush.msra.mxu0 %v193
    %208 = vmatpush.msra.mxu0 %v192
    %209 = vmatpush.msra.mxu0 %v191
    %210 = vmatpush.msra.mxu0 %v190
    %211 = vmatpush.msra.mxu0 %v189
    %212 = vmatpush.msra.mxu0 %v188
    %213 = vmatpush.msra.mxu0 %v187
    %214 = vmatpush.msra.mxu0 %v186
    %215 = vmatpush.msra.mxu0 %v185
    %216 = vmatpush.msra.mxu0 %v184
    %217 = vmatpush.msra.mxu0 %v183
    %218 = vmatpush.msra.mxu0 %v182
    %219 = vmatmul.f32.gmra.mxu0 %v180
    %v220 = vpop.f32.mrf.mxu0
    %v221 = vadd.f32 %v201, %v220
    %222 = vdwg.mxu0
    %v223 = vmul.f32 %v221, 0.01
    %v224 = vmax.f32 %v221, %v223
    %v225 = vrot.slane %v224, 4
    %v226 = vadd.f32 %v224, %v225
    %v227 = vrot.slane %v226, 2
    %v228 = vadd.f32 %v226, %v227
    %v229 = vrot.slane %v228, 1
    %v230 = vadd.f32 %v228, %v229
    %v231 = vmul.f32 %v224, %v224
    %v232 = vrot.slane %v231, 4
    %v233 = vadd.f32 %v231, %v232
    %v234 = vrot.slane %v233, 2
    %v235 = vadd.f32 %v233, %v234
    %v236 = vrot.slane %v235, 1
    %v237 = vadd.f32 %v235, %v236
    %v238 = vmul.f32 %v230, 0.125
    %v239 = vmul.f32 %v237, 0.125
    %v240 = vmul.f32 %v238, %v238
    %v241 = vsub.f32 %v239, %v240
    %v242 = vmax.f32 %v241, 0.0
    %v243 = vsub.f32 %v224, %v238
    %v244 = vadd.f32 %v242, 1e-05
    %v245 = vrsqrt.pop %v244
    %v246 = vmul.f32 %v245, %v244
    %v247 = vmul.f32 %v246, %v245
    %v248 = vmul.f32 0.5, %v247
    %v249 = vsub.f32 1.5, %v248
    %v250 = vmul.f32 %v245, %v249
    %vm251 = vweird.f32 %v244
    %vm252 = vweird.f32 %v245
    %vm253 = vmor %vm251, %vm252
    %v254 = vsel %vm253, %v245, %v250
    %v255 = vmul.f32 %v243, %v254
    %s256 = scalar_lea.vmem [#allocation8], 1
    %v257 = vld [vmem:[%s256] sm:$0x1]
    %v259 = vperm.slane %v257, 0
    %v261 = vmul.f32 %v255, %v259
    %s262 = scalar_lea.vmem [#allocation10], 1
    %v263 = vld [vmem:[%s262] sm:$0x1]
    %v265 = vperm.slane %v263, 0
    %v267 = vadd.f32 %v261, %v265
    %s268 = scalar_lea.vmem [#allocation5], 256
    %v269 = vld [vmem:[%s268] sm:$0xff]
    %v270 = vld [vmem:[%s268 + $0x8] sm:$0xff]
    %v271 = vld [vmem:[%s268 + $0x10] sm:$0xff]
    %v272 = vld [vmem:[%s268 + $0x18] sm:$0xff]
    %v273 = vld [vmem:[%s268 + $0x20] sm:$0xff]
    %v274 = vld [vmem:[%s268 + $0x28] sm:$0xff]
    %v275 = vld [vmem:[%s268 + $0x30] sm:$0xff]
    %v276 = vld [vmem:[%s268 + $0x38] sm:$0xff]
    %v277 = vld [vmem:[%s268 + $0x40] sm:$0xff]
    %v278 = vld [vmem:[%s268 + $0x48] sm:$0xff]
    %v279 = vld [vmem:[%s268 + $0x50] sm:$0xff]
    %v280 = vld [vmem:[%s268 + $0x58] sm:$0xff]
    %v281 = vld [vmem:[%s268 + $0x60] sm:$0xff]
    %v282 = vld [vmem:[%s268 + $0x68] sm:$0xff]
    %v283 = vld [vmem:[%s268 + $0x70] sm:$0xff]
    %v284 = vld [vmem:[%s268 + $0x78] sm:$0xff]
    %s285 = scalar_lea.vmem [#allocation7], 2
    %v286 = vld [vmem:[%s285] sm:$0x1]
    %v288 = vperm.slane %v286, 0
    %290 = vmatpush.msra.mxu0 %v284
    %291 = vmatpush.msra.mxu0 %v283
    %292 = vmatpush.msra.mxu0 %v282
    %293 = vmatpush.msra.mxu0 %v281
    %294 = vmatpush.msra.mxu0 %v280
    %295 = vmatpush.msra.mxu0 %v279
    %296 = vmatpush.msra.mxu0 %v278
    %297 = vmatpush.msra.mxu0 %v277
    %298 = vmatpush.msra.mxu0 %v276
    %299 = vmatpush.msra.mxu0 %v275
    %300 = vmatpush.msra.mxu0 %v274
    %301 = vmatpush.msra.mxu0 %v273
    %302 = vmatpush.msra.mxu0 %v272
    %303 = vmatpush.msra.mxu0 %v271
    %304 = vmatpush.msra.mxu0 %v270
    %305 = vmatpush.msra.mxu0 %v269
    %306 = vmatmul.f32.gmra.mxu0 %v267
    %v307 = vpop.f32.mrf.mxu0
    %v308 = vadd.f32 %v288, %v307
    %309 = vdwg.mxu0
    %v310 = vmul.f32 %v308, 0.01
    %v311 = vmax.f32 %v308, %v310
    %v312 = vrot.slane %v311, 4
    %v313 = vadd.f32 %v311, %v312
    %v314 = vrot.slane %v313, 2
    %v315 = vadd.f32 %v313, %v314
    %v316 = vrot.slane %v315, 1
    %v317 = vadd.f32 %v315, %v316
    %v318 = vmul.f32 %v311, %v311
    %v319 = vrot.slane %v318, 4
    %v320 = vadd.f32 %v318, %v319
    %v321 = vrot.slane %v320, 2
    %v322 = vadd.f32 %v320, %v321
    %v323 = vrot.slane %v322, 1
    %v324 = vadd.f32 %v322, %v323
    %v325 = vmul.f32 %v317, 0.125
    %v326 = vmul.f32 %v324, 0.125
    %v327 = vmul.f32 %v325, %v325
    %v328 = vsub.f32 %v326, %v327
    %v329 = vmax.f32 %v328, 0.0
    %v330 = vsub.f32 %v311, %v325
    %v331 = vadd.f32 %v329, 1e-05
    %v332 = vrsqrt.pop %v331
    %v333 = vmul.f32 %v332, %v331
    %v334 = vmul.f32 %v333, %v332
    %v335 = vmul.f32 0.5, %v334
    %v336 = vsub.f32 1.5, %v335
    %v337 = vmul.f32 %v332, %v336
    %vm338 = vweird.f32 %v331
    %vm339 = vweird.f32 %v332
    %vm340 = vmor %vm338, %vm339
    %v341 = vsel %vm340, %v332, %v337
    %v342 = vmul.f32 %v330, %v341
    %s343 = scalar_lea.vmem [#allocation8], 2
    %v344 = vld [vmem:[%s343] sm:$0x1]
    %v346 = vperm.slane %v344, 0
    %v348 = vmul.f32 %v342, %v346
    %s349 = scalar_lea.vmem [#allocation10], 2
    %v350 = vld [vmem:[%s349] sm:$0x1]
    %v352 = vperm.slane %v350, 0
    %v354 = vadd.f32 %v348, %v352
    %s355 = scalar_lea.vmem [#allocation5], 384
    %v356 = vld [vmem:[%s355] sm:$0xff]
    %v357 = vld [vmem:[%s355 + $0x8] sm:$0xff]
    %v358 = vld [vmem:[%s355 + $0x10] sm:$0xff]
    %v359 = vld [vmem:[%s355 + $0x18] sm:$0xff]
    %v360 = vld [vmem:[%s355 + $0x20] sm:$0xff]
    %v361 = vld [vmem:[%s355 + $0x28] sm:$0xff]
    %v362 = vld [vmem:[%s355 + $0x30] sm:$0xff]
    %v363 = vld [vmem:[%s355 + $0x38] sm:$0xff]
    %v364 = vld [vmem:[%s355 + $0x40] sm:$0xff]
    %v365 = vld [vmem:[%s355 + $0x48] sm:$0xff]
    %v366 = vld [vmem:[%s355 + $0x50] sm:$0xff]
    %v367 = vld [vmem:[%s355 + $0x58] sm:$0xff]
    %v368 = vld [vmem:[%s355 + $0x60] sm:$0xff]
    %v369 = vld [vmem:[%s355 + $0x68] sm:$0xff]
    %v370 = vld [vmem:[%s355 + $0x70] sm:$0xff]
    %v371 = vld [vmem:[%s355 + $0x78] sm:$0xff]
    %s372 = scalar_lea.vmem [#allocation7], 3
    %v373 = vld [vmem:[%s372] sm:$0x1]
    %v375 = vperm.slane %v373, 0
    %377 = vmatpush.msra.mxu0 %v371
    %378 = vmatpush.msra.mxu0 %v370
    %379 = vmatpush.msra.mxu0 %v369
    %380 = vmatpush.msra.mxu0 %v368
    %381 = vmatpush.msra.mxu0 %v367
    %382 = vmatpush.msra.mxu0 %v366
    %383 = vmatpush.msra.mxu0 %v365
    %384 = vmatpush.msra.mxu0 %v364
    %385 = vmatpush.msra.mxu0 %v363
    %386 = vmatpush.msra.mxu0 %v362
    %387 = vmatpush.msra.mxu0 %v361
    %388 = vmatpush.msra.mxu0 %v360
    %389 = vmatpush.msra.mxu0 %v359
    %390 = vmatpush.msra.mxu0 %v358
    %391 = vmatpush.msra.mxu0 %v357
    %392 = vmatpush.msra.mxu0 %v356
    %393 = vmatmul.f32.gmra.mxu0 %v354
    %v394 = vpop.f32.mrf.mxu0
    %v395 = vadd.f32 %v375, %v394
    %396 = vdwg.mxu0
    %v397 = vmul.f32 %v395, 0.01
    %v398 = vmax.f32 %v395, %v397
    %v399 = vrot.slane %v398, 4
    %v400 = vadd.f32 %v398, %v399
    %v401 = vrot.slane %v400, 2
    %v402 = vadd.f32 %v400, %v401
    %v403 = vrot.slane %v402, 1
    %v404 = vadd.f32 %v402, %v403
    %v405 = vmul.f32 %v398, %v398
    %v406 = vrot.slane %v405, 4
    %v407 = vadd.f32 %v405, %v406
    %v408 = vrot.slane %v407, 2
    %v409 = vadd.f32 %v407, %v408
    %v410 = vrot.slane %v409, 1
    %v411 = vadd.f32 %v409, %v410
    %v412 = vmul.f32 %v404, 0.125
    %v413 = vmul.f32 %v411, 0.125
    %v414 = vmul.f32 %v412, %v412
    %v415 = vsub.f32 %v413, %v414
    %v416 = vmax.f32 %v415, 0.0
    %v417 = vsub.f32 %v398, %v412
    %v418 = vadd.f32 %v416, 1e-05
    %v419 = vrsqrt.pop %v418
    %v420 = vmul.f32 %v419, %v418
    %v421 = vmul.f32 %v420, %v419
    %v422 = vmul.f32 0.5, %v421
    %v423 = vsub.f32 1.5, %v422
    %v424 = vmul.f32 %v419, %v423
    %vm425 = vweird.f32 %v418
    %vm426 = vweird.f32 %v419
    %vm427 = vmor %vm425, %vm426
    %v428 = vsel %vm427, %v419, %v424
    %v429 = vmul.f32 %v417, %v428
    %s430 = scalar_lea.vmem [#allocation8], 3
    %v431 = vld [vmem:[%s430] sm:$0x1]
    %v433 = vperm.slane %v431, 0
    %v435 = vmul.f32 %v429, %v433
    %s436 = scalar_lea.vmem [#allocation10], 3
    %v437 = vld [vmem:[%s436] sm:$0x1]
    %v439 = vperm.slane %v437, 0
    %v441 = vadd.f32 %v435, %v439
    %s442 = scalar_lea.vmem [#allocation5], 512
    %v443 = vld [vmem:[%s442] sm:$0xff]
    %v444 = vld [vmem:[%s442 + $0x8] sm:$0xff]
    %v445 = vld [vmem:[%s442 + $0x10] sm:$0xff]
    %v446 = vld [vmem:[%s442 + $0x18] sm:$0xff]
    %v447 = vld [vmem:[%s442 + $0x20] sm:$0xff]
    %v448 = vld [vmem:[%s442 + $0x28] sm:$0xff]
    %v449 = vld [vmem:[%s442 + $0x30] sm:$0xff]
    %v450 = vld [vmem:[%s442 + $0x38] sm:$0xff]
    %v451 = vld [vmem:[%s442 + $0x40] sm:$0xff]
    %v452 = vld [vmem:[%s442 + $0x48] sm:$0xff]
    %v453 = vld [vmem:[%s442 + $0x50] sm:$0xff]
    %v454 = vld [vmem:[%s442 + $0x58] sm:$0xff]
    %v455 = vld [vmem:[%s442 + $0x60] sm:$0xff]
    %v456 = vld [vmem:[%s442 + $0x68] sm:$0xff]
    %v457 = vld [vmem:[%s442 + $0x70] sm:$0xff]
    %v458 = vld [vmem:[%s442 + $0x78] sm:$0xff]
    %s459 = scalar_lea.vmem [#allocation7], 4
    %v460 = vld [vmem:[%s459] sm:$0x1]
    %v462 = vperm.slane %v460, 0
    %464 = vmatpush.msra.mxu0 %v458
    %465 = vmatpush.msra.mxu0 %v457
    %466 = vmatpush.msra.mxu0 %v456
    %467 = vmatpush.msra.mxu0 %v455
    %468 = vmatpush.msra.mxu0 %v454
    %469 = vmatpush.msra.mxu0 %v453
    %470 = vmatpush.msra.mxu0 %v452
    %471 = vmatpush.msra.mxu0 %v451
    %472 = vmatpush.msra.mxu0 %v450
    %473 = vmatpush.msra.mxu0 %v449
    %474 = vmatpush.msra.mxu0 %v448
    %475 = vmatpush.msra.mxu0 %v447
    %476 = vmatpush.msra.mxu0 %v446
    %477 = vmatpush.msra.mxu0 %v445
    %478 = vmatpush.msra.mxu0 %v444
    %479 = vmatpush.msra.mxu0 %v443
    %480 = vmatmul.f32.gmra.mxu0 %v441
    %v481 = vpop.f32.mrf.mxu0
    %v482 = vadd.f32 %v462, %v481
    %483 = vdwg.mxu0
    %v484 = vmul.f32 %v482, 0.01
    %v485 = vmax.f32 %v482, %v484
    %v486 = vrot.slane %v485, 4
    %v487 = vadd.f32 %v485, %v486
    %v488 = vrot.slane %v487, 2
    %v489 = vadd.f32 %v487, %v488
    %v490 = vrot.slane %v489, 1
    %v491 = vadd.f32 %v489, %v490
    %v492 = vmul.f32 %v485, %v485
    %v493 = vrot.slane %v492, 4
    %v494 = vadd.f32 %v492, %v493
    %v495 = vrot.slane %v494, 2
    %v496 = vadd.f32 %v494, %v495
    %v497 = vrot.slane %v496, 1
    %v498 = vadd.f32 %v496, %v497
    %v499 = vmul.f32 %v491, 0.125
    %v500 = vmul.f32 %v498, 0.125
    %v501 = vmul.f32 %v499, %v499
    %v502 = vsub.f32 %v500, %v501
    %v503 = vmax.f32 %v502, 0.0
    %v504 = vsub.f32 %v485, %v499
    %v505 = vadd.f32 %v503, 1e-05
    %v506 = vrsqrt.pop %v505
    %v507 = vmul.f32 %v506, %v505
    %v508 = vmul.f32 %v507, %v506
    %v509 = vmul.f32 0.5, %v508
    %v510 = vsub.f32 1.5, %v509
    %v511 = vmul.f32 %v506, %v510
    %vm512 = vweird.f32 %v505
    %vm513 = vweird.f32 %v506
    %vm514 = vmor %vm512, %vm513
    %v515 = vsel %vm514, %v506, %v511
    %v516 = vmul.f32 %v504, %v515
    %s517 = scalar_lea.vmem [#allocation8], 4
    %v518 = vld [vmem:[%s517] sm:$0x1]
    %v520 = vperm.slane %v518, 0
    %v522 = vmul.f32 %v516, %v520
    %s523 = scalar_lea.vmem [#allocation10], 4
    %v524 = vld [vmem:[%s523] sm:$0x1]
    %v526 = vperm.slane %v524, 0
    %v528 = vadd.f32 %v522, %v526
    %s529 = scalar_lea.vmem [#allocation5], 640
    %v530 = vld [vmem:[%s529] sm:$0xff]
    %v531 = vld [vmem:[%s529 + $0x8] sm:$0xff]
    %v532 = vld [vmem:[%s529 + $0x10] sm:$0xff]
    %v533 = vld [vmem:[%s529 + $0x18] sm:$0xff]
    %v534 = vld [vmem:[%s529 + $0x20] sm:$0xff]
    %v535 = vld [vmem:[%s529 + $0x28] sm:$0xff]
    %v536 = vld [vmem:[%s529 + $0x30] sm:$0xff]
    %v537 = vld [vmem:[%s529 + $0x38] sm:$0xff]
    %v538 = vld [vmem:[%s529 + $0x40] sm:$0xff]
    %v539 = vld [vmem:[%s529 + $0x48] sm:$0xff]
    %v540 = vld [vmem:[%s529 + $0x50] sm:$0xff]
    %v541 = vld [vmem:[%s529 + $0x58] sm:$0xff]
    %v542 = vld [vmem:[%s529 + $0x60] sm:$0xff]
    %v543 = vld [vmem:[%s529 + $0x68] sm:$0xff]
    %v544 = vld [vmem:[%s529 + $0x70] sm:$0xff]
    %v545 = vld [vmem:[%s529 + $0x78] sm:$0xff]
    %s546 = scalar_lea.vmem [#allocation7], 5
    %v547 = vld [vmem:[%s546] sm:$0x1]
    %v549 = vperm.slane %v547, 0
    %551 = vmatpush.msra.mxu0 %v545
    %552 = vmatpush.msra.mxu0 %v544
    %553 = vmatpush.msra.mxu0 %v543
    %554 = vmatpush.msra.mxu0 %v542
    %555 = vmatpush.msra.mxu0 %v541
    %556 = vmatpush.msra.mxu0 %v540
    %557 = vmatpush.msra.mxu0 %v539
    %558 = vmatpush.msra.mxu0 %v538
    %559 = vmatpush.msra.mxu0 %v537
    %560 = vmatpush.msra.mxu0 %v536
    %561 = vmatpush.msra.mxu0 %v535
    %562 = vmatpush.msra.mxu0 %v534
    %563 = vmatpush.msra.mxu0 %v533
    %564 = vmatpush.msra.mxu0 %v532
    %565 = vmatpush.msra.mxu0 %v531
    %566 = vmatpush.msra.mxu0 %v530
    %567 = vmatmul.f32.gmra.mxu0 %v528
    %v568 = vpop.f32.mrf.mxu0
    %v569 = vadd.f32 %v549, %v568
    %570 = vdwg.mxu0
    %v571 = vmul.f32 %v569, 0.01
    %v572 = vmax.f32 %v569, %v571
    %v573 = vrot.slane %v572, 4
    %v574 = vadd.f32 %v572, %v573
    %v575 = vrot.slane %v574, 2
    %v576 = vadd.f32 %v574, %v575
    %v577 = vrot.slane %v576, 1
    %v578 = vadd.f32 %v576, %v577
    %v579 = vmul.f32 %v572, %v572
    %v580 = vrot.slane %v579, 4
    %v581 = vadd.f32 %v579, %v580
    %v582 = vrot.slane %v581, 2
    %v583 = vadd.f32 %v581, %v582
    %v584 = vrot.slane %v583, 1
    %v585 = vadd.f32 %v583, %v584
    %v586 = vmul.f32 %v578, 0.125
    %v587 = vmul.f32 %v585, 0.125
    %v588 = vmul.f32 %v586, %v586
    %v589 = vsub.f32 %v587, %v588
    %v590 = vmax.f32 %v589, 0.0
    %v591 = vsub.f32 %v572, %v586
    %v592 = vadd.f32 %v590, 1e-05
    %v593 = vrsqrt.pop %v592
    %v594 = vmul.f32 %v593, %v592
    %v595 = vmul.f32 %v594, %v593
    %v596 = vmul.f32 0.5, %v595
    %v597 = vsub.f32 1.5, %v596
    %v598 = vmul.f32 %v593, %v597
    %vm599 = vweird.f32 %v592
    %vm600 = vweird.f32 %v593
    %vm601 = vmor %vm599, %vm600
    %v602 = vsel %vm601, %v593, %v598
    %v603 = vmul.f32 %v591, %v602
    %s604 = scalar_lea.vmem [#allocation8], 5
    %v605 = vld [vmem:[%s604] sm:$0x1]
    %v607 = vperm.slane %v605, 0
    %v609 = vmul.f32 %v603, %v607
    %s610 = scalar_lea.vmem [#allocation10], 5
    %v611 = vld [vmem:[%s610] sm:$0x1]
    %v613 = vperm.slane %v611, 0
    %v615 = vadd.f32 %v609, %v613
    %616 = vst [vmem:[#allocation11] sm:$0xff] %v615
    // Predicated region
    $region42: #{autoencoder_forward_pallas.1} parent=1 // pred_check
      _
    $region43: #{autoencoder_forward_pallas.1} parent=1 // pred_check_branch
      %618 = sbr.rel (0) target = $region45
    $region44: #{autoencoder_forward_pallas.1} parent=1 // pred_region
      %620 = vsyncadd [#allocation4], 0
      %s622 = sshll.u32 [#allocation11], 4
      %s623 = int_to_ptr.vmem [resolvable:$true] %s622
      %s624 = sshll.u32 %s5, 4
      %s625 = int_to_ptr.hbm [resolvable:$true] %s624
      %627 = dma.vmem_to_hbm [thread:$0]  %s623, 128, %s625, [#allocation4]
    $region45: #{autoencoder_forward_pallas.1} parent=1 // pred_fallthru
      _
    // Predicated region
    $region46: #{autoencoder_forward_pallas.1} parent=1 // pred_check
      _
    $region47: #{autoencoder_forward_pallas.1} parent=1 // pred_check_branch
      %629 = sbr.rel (0) target = $region49
    $region48: #{autoencoder_forward_pallas.1} parent=1 // pred_region
      %631 = dma.done [#allocation4], 128
    $region49: #{autoencoder_forward_pallas.1} parent=1 // pred_fallthru
      _
    %632 = vsyncpa [#allocation3], 1
    %633 = vsyncpa [#allocation6], 1
    %634 = vsyncpa [#allocation9], 1
    %635 = vsyncpa [#allocation4], 1

</llo_original>
